<compile_context>
chip_gen: v6e
topology: v6e:2x2x1
jax: 0.10.0
libtpu: 0.0.40
codegen_flags: <defaults>
</compile_context>

<pallas_src>
import jax
import jax.numpy as jnp
from jax.experimental import pallas as pl
from jax.experimental.pallas import tpu as pltpu


# Flattened parameter layout inside the SMEM vector (33 f32 scalars):
#   [0:4)   w1  (bp1.weight, (4,1): w1[k] multiplies x)
#   [4:8)   b1
#   [8:24)  w2  (bp2.weight row-major, w2[j,k] at 8 + 4*j + k)
#   [24:28) b2
#   [28:32) w3  (bp3.weight, (1,4))
#   [32]    b3
_W1, _B1, _W2, _B2, _W3, _B3 = 0, 4, 8, 24, 28, 32
_N_PARAMS = 33
_LANES = 128


def mlp_kernel(p_ref, x_ref, o_ref):
    # x_ref / o_ref: (tile_rows, 128) lane-dense tiles of flattened elements.
    # p_ref: (33,) f32 in SMEM; scalar reads broadcast for free on the VPU.
    x = x_ref[...]

    # Layer 1: 1 -> 4, ReLU (elementwise broadcast mul-add, no MXU).
    h1 = [jnp.maximum(x * p_ref[_W1 + k] + p_ref[_B1 + k], 0.0) for k in range(4)]

    # Layer 2: 4 -> 4, ReLU.
    h2 = []
    for j in range(4):
        acc = h1[0] * p_ref[_W2 + 4 * j + 0]
        for k in range(1, 4):
            acc = acc + h1[k] * p_ref[_W2 + 4 * j + k]
        h2.append(jnp.maximum(acc + p_ref[_B2 + j], 0.0))

    # Layer 3: 4 -> 1.
    out = h2[0] * p_ref[_W3 + 0]
    for j in range(1, 4):
        out = out + h2[j] * p_ref[_W3 + j]
    o_ref[...] = out + p_ref[_B3]


def liner_param_forward(x, params, *, tile_rows=512):
    """x: (batch, seq, 1) float32. Returns (batch, seq, 1) float32."""
    b, s, f = x.shape
    assert f == 1
    n = b * s

    # Flatten all 33 weight/bias scalars into one small SMEM vector
    # (PyTorch layout: weight is (out, in), kept row-major).
    p = jnp.concatenate([
        params["bp1_w"].reshape(-1),   # 4
        params["bp1_b"].reshape(-1),   # 4
        params["bp2_w"].reshape(-1),   # 16  (w2[j,k] at 8 + 4*j + k)
        params["bp2_b"].reshape(-1),   # 4
        params["bp3_w"].reshape(-1),   # 4
        params["bp3_b"].reshape(-1),   # 1
    ]).astype(jnp.float32)
    assert p.shape == (_N_PARAMS,)

    # Lane-dense layout: elements along the 128-lane axis, rows along sublanes.
    rows = max(1, pl.cdiv(n, _LANES))
    if rows < tile_rows:
        tile_rows = ((rows + 7) // 8) * 8              # at least one (8,128) tile
    rows_padded = ((rows + tile_rows - 1) // tile_rows) * tile_rows
    n_padded = rows_padded * _LANES

    # Pad the remainder in the wrapper (cheaper than shrinking the tile);
    # padded garbage is sliced off after the kernel.
    x_flat = jnp.pad(x.reshape(-1).astype(jnp.float32), (0, n_padded - n))
    x2d = x_flat.reshape(rows_padded, _LANES)

    grid = (rows_padded // tile_rows,)
    out2d = pl.pallas_call(
        mlp_kernel,
        out_shape=jax.ShapeDtypeStruct((rows_padded, _LANES), jnp.float32),
        grid=grid,
        in_specs=[
            pl.BlockSpec(memory_space=pltpu.MemorySpace.SMEM),    # 33 scalars
            pl.BlockSpec((tile_rows, _LANES), lambda i: (i, 0)),  # x tile
        ],
        out_specs=pl.BlockSpec((tile_rows, _LANES), lambda i: (i, 0)),
        compiler_params=pltpu.CompilerParams(
            dimension_semantics=("parallel",),
        ),
    )(p, x2d)

    return out2d.reshape(-1)[:n].reshape(b, s, 1)


def init_params(key):
    """Deterministic init matching PyTorch Linear parameter shapes
    (uniform(-1/sqrt(in), 1/sqrt(in)), like nn.Linear's default)."""
    ks = jax.random.split(key, 6)

    def lin(kw, kb, fan_in, fan_out):
        bound = 1.0 / jnp.sqrt(jnp.float32(fan_in))
        w = jax.random.uniform(kw, (fan_out, fan_in), jnp.float32, -bound, bound)
        b = jax.random.uniform(kb, (fan_out,), jnp.float32, -bound, bound)
        return w, b

    w1, b1 = lin(ks[0], ks[1], 1, 4)
    w2, b2 = lin(ks[2], ks[3], 4, 4)
    w3, b3 = lin(ks[4], ks[5], 4, 1)
    return {
        "bp1_w": w1, "bp1_b": b1,
        "bp2_w": w2, "bp2_b": b2,
        "bp3_w": w3, "bp3_b": b3,
    }


def reference_forward(x, params):
    """Pure-JAX reference of the PyTorch forward."""
    h = jnp.maximum(x @ params["bp1_w"].T + params["bp1_b"], 0.0)
    h = jnp.maximum(h @ params["bp2_w"].T + params["bp2_b"], 0.0)
    return h @ params["bp3_w"].T + params["bp3_b"]


if __name__ == "__main__":
    key = jax.random.PRNGKey(0)
    kp, kx1, kx2 = jax.random.split(key, 3)
    params = init_params(kp)

    # Small input consistent with the module: (batch=2, seq=8, feature=1).
    x_small = jax.random.normal(kx1, (2, 8, 1), dtype=jnp.float32)
    out_small = jax.block_until_ready(liner_param_forward(x_small, params))
    ref_small = reference_forward(x_small, params)
    assert out_small.shape == (2, 8, 1)
    assert jnp.allclose(out_small, ref_small, atol=1e-5, rtol=1e-5), "mismatch (small)"

    # Non-divisible, multi-tile case to exercise padding + the tiled grid path.
    x_big = jax.random.normal(kx2, (3, 70001, 1), dtype=jnp.float32)
    out_big = jax.block_until_ready(liner_param_forward(x_big, params))
    ref_big = reference_forward(x_big, params)
    assert out_big.shape == x_big.shape
    assert jnp.allclose(out_big, ref_big, atol=1e-5, rtol=1e-5), "mismatch (big)"

    print("KERNEL_OK")
</pallas_src>

<mosaic_0001>
module attributes {stable_mosaic.version = 11 : i64} {
  func.func @mlp_kernel(%arg0: i32, %arg1: memref<33xf32, #tpu.memory_space<smem>>, %arg2: memref<8x128xf32, #tpu.memory_space<vmem>>, %arg3: memref<8x128xf32, #tpu.memory_space<vmem>>) attributes {dimension_semantics = [#tpu.dimension_semantics<parallel>], iteration_bounds = array<i64: 1>, scalar_prefetch = 0 : i64, scratch_operands = 0 : i64, tpu.core_type = #tpu.core_type<tc>, window_params = [{transform_indices = @transform_0, window_bounds = array<i64: 33>}, {transform_indices = @transform_1, window_bounds = array<i64: 8, 128>}, {transform_indices = @transform_2, window_bounds = array<i64: 8, 128>}]} {
    %c0 = arith.constant 0 : index
    %c0_0 = arith.constant 0 : index
    %0 = vector.load %arg2[%c0, %c0_0] : memref<8x128xf32, #tpu.memory_space<vmem>>, vector<8x128xf32>
    %c0_1 = arith.constant 0 : index
    %1 = memref.load %arg1[%c0_1] : memref<33xf32, #tpu.memory_space<smem>>
    %2 = vector.broadcast %1 : f32 to vector<8x128xf32>
    %3 = arith.mulf %0, %2 : vector<8x128xf32>
    %c4 = arith.constant 4 : index
    %4 = memref.load %arg1[%c4] : memref<33xf32, #tpu.memory_space<smem>>
    %5 = vector.broadcast %4 : f32 to vector<8x128xf32>
    %6 = arith.addf %3, %5 : vector<8x128xf32>
    %cst = arith.constant 0.000000e+00 : f32
    %7 = vector.broadcast %cst : f32 to vector<8x128xf32>
    %8 = arith.maximumf %6, %7 : vector<8x128xf32>
    %c1 = arith.constant 1 : index
    %9 = memref.load %arg1[%c1] : memref<33xf32, #tpu.memory_space<smem>>
    %10 = vector.broadcast %9 : f32 to vector<8x128xf32>
    %11 = arith.mulf %0, %10 : vector<8x128xf32>
    %c5 = arith.constant 5 : index
    %12 = memref.load %arg1[%c5] : memref<33xf32, #tpu.memory_space<smem>>
    %13 = vector.broadcast %12 : f32 to vector<8x128xf32>
    %14 = arith.addf %11, %13 : vector<8x128xf32>
    %cst_2 = arith.constant 0.000000e+00 : f32
    %15 = vector.broadcast %cst_2 : f32 to vector<8x128xf32>
    %16 = arith.maximumf %14, %15 : vector<8x128xf32>
    %c2 = arith.constant 2 : index
    %17 = memref.load %arg1[%c2] : memref<33xf32, #tpu.memory_space<smem>>
    %18 = vector.broadcast %17 : f32 to vector<8x128xf32>
    %19 = arith.mulf %0, %18 : vector<8x128xf32>
    %c6 = arith.constant 6 : index
    %20 = memref.load %arg1[%c6] : memref<33xf32, #tpu.memory_space<smem>>
    %21 = vector.broadcast %20 : f32 to vector<8x128xf32>
    %22 = arith.addf %19, %21 : vector<8x128xf32>
    %cst_3 = arith.constant 0.000000e+00 : f32
    %23 = vector.broadcast %cst_3 : f32 to vector<8x128xf32>
    %24 = arith.maximumf %22, %23 : vector<8x128xf32>
    %c3 = arith.constant 3 : index
    %25 = memref.load %arg1[%c3] : memref<33xf32, #tpu.memory_space<smem>>
    %26 = vector.broadcast %25 : f32 to vector<8x128xf32>
    %27 = arith.mulf %0, %26 : vector<8x128xf32>
    %c7 = arith.constant 7 : index
    %28 = memref.load %arg1[%c7] : memref<33xf32, #tpu.memory_space<smem>>
    %29 = vector.broadcast %28 : f32 to vector<8x128xf32>
    %30 = arith.addf %27, %29 : vector<8x128xf32>
    %cst_4 = arith.constant 0.000000e+00 : f32
    %31 = vector.broadcast %cst_4 : f32 to vector<8x128xf32>
    %32 = arith.maximumf %30, %31 : vector<8x128xf32>
    %c8 = arith.constant 8 : index
    %33 = memref.load %arg1[%c8] : memref<33xf32, #tpu.memory_space<smem>>
    %34 = vector.broadcast %33 : f32 to vector<8x128xf32>
    %35 = arith.mulf %8, %34 : vector<8x128xf32>
    %c9 = arith.constant 9 : index
    %36 = memref.load %arg1[%c9] : memref<33xf32, #tpu.memory_space<smem>>
    %37 = vector.broadcast %36 : f32 to vector<8x128xf32>
    %38 = arith.mulf %16, %37 : vector<8x128xf32>
    %39 = arith.addf %35, %38 : vector<8x128xf32>
    %c10 = arith.constant 10 : index
    %40 = memref.load %arg1[%c10] : memref<33xf32, #tpu.memory_space<smem>>
    %41 = vector.broadcast %40 : f32 to vector<8x128xf32>
    %42 = arith.mulf %24, %41 : vector<8x128xf32>
    %43 = arith.addf %39, %42 : vector<8x128xf32>
    %c11 = arith.constant 11 : index
    %44 = memref.load %arg1[%c11] : memref<33xf32, #tpu.memory_space<smem>>
    %45 = vector.broadcast %44 : f32 to vector<8x128xf32>
    %46 = arith.mulf %32, %45 : vector<8x128xf32>
    %47 = arith.addf %43, %46 : vector<8x128xf32>
    %c24 = arith.constant 24 : index
    %48 = memref.load %arg1[%c24] : memref<33xf32, #tpu.memory_space<smem>>
    %49 = vector.broadcast %48 : f32 to vector<8x128xf32>
    %50 = arith.addf %47, %49 : vector<8x128xf32>
    %cst_5 = arith.constant 0.000000e+00 : f32
    %51 = vector.broadcast %cst_5 : f32 to vector<8x128xf32>
    %52 = arith.maximumf %50, %51 : vector<8x128xf32>
    %c12 = arith.constant 12 : index
    %53 = memref.load %arg1[%c12] : memref<33xf32, #tpu.memory_space<smem>>
    %54 = vector.broadcast %53 : f32 to vector<8x128xf32>
    %55 = arith.mulf %8, %54 : vector<8x128xf32>
    %c13 = arith.constant 13 : index
    %56 = memref.load %arg1[%c13] : memref<33xf32, #tpu.memory_space<smem>>
    %57 = vector.broadcast %56 : f32 to vector<8x128xf32>
    %58 = arith.mulf %16, %57 : vector<8x128xf32>
    %59 = arith.addf %55, %58 : vector<8x128xf32>
    %c14 = arith.constant 14 : index
    %60 = memref.load %arg1[%c14] : memref<33xf32, #tpu.memory_space<smem>>
    %61 = vector.broadcast %60 : f32 to vector<8x128xf32>
    %62 = arith.mulf %24, %61 : vector<8x128xf32>
    %63 = arith.addf %59, %62 : vector<8x128xf32>
    %c15 = arith.constant 15 : index
    %64 = memref.load %arg1[%c15] : memref<33xf32, #tpu.memory_space<smem>>
    %65 = vector.broadcast %64 : f32 to vector<8x128xf32>
    %66 = arith.mulf %32, %65 : vector<8x128xf32>
    %67 = arith.addf %63, %66 : vector<8x128xf32>
    %c25 = arith.constant 25 : index
    %68 = memref.load %arg1[%c25] : memref<33xf32, #tpu.memory_space<smem>>
    %69 = vector.broadcast %68 : f32 to vector<8x128xf32>
    %70 = arith.addf %67, %69 : vector<8x128xf32>
    %cst_6 = arith.constant 0.000000e+00 : f32
    %71 = vector.broadcast %cst_6 : f32 to vector<8x128xf32>
    %72 = arith.maximumf %70, %71 : vector<8x128xf32>
    %c16 = arith.constant 16 : index
    %73 = memref.load %arg1[%c16] : memref<33xf32, #tpu.memory_space<smem>>
    %74 = vector.broadcast %73 : f32 to vector<8x128xf32>
    %75 = arith.mulf %8, %74 : vector<8x128xf32>
    %c17 = arith.constant 17 : index
    %76 = memref.load %arg1[%c17] : memref<33xf32, #tpu.memory_space<smem>>
    %77 = vector.broadcast %76 : f32 to vector<8x128xf32>
    %78 = arith.mulf %16, %77 : vector<8x128xf32>
    %79 = arith.addf %75, %78 : vector<8x128xf32>
    %c18 = arith.constant 18 : index
    %80 = memref.load %arg1[%c18] : memref<33xf32, #tpu.memory_space<smem>>
    %81 = vector.broadcast %80 : f32 to vector<8x128xf32>
    %82 = arith.mulf %24, %81 : vector<8x128xf32>
    %83 = arith.addf %79, %82 : vector<8x128xf32>
    %c19 = arith.constant 19 : index
    %84 = memref.load %arg1[%c19] : memref<33xf32, #tpu.memory_space<smem>>
    %85 = vector.broadcast %84 : f32 to vector<8x128xf32>
    %86 = arith.mulf %32, %85 : vector<8x128xf32>
    %87 = arith.addf %83, %86 : vector<8x128xf32>
    %c26 = arith.constant 26 : index
    %88 = memref.load %arg1[%c26] : memref<33xf32, #tpu.memory_space<smem>>
    %89 = vector.broadcast %88 : f32 to vector<8x128xf32>
    %90 = arith.addf %87, %89 : vector<8x128xf32>
    %cst_7 = arith.constant 0.000000e+00 : f32
    %91 = vector.broadcast %cst_7 : f32 to vector<8x128xf32>
    %92 = arith.maximumf %90, %91 : vector<8x128xf32>
    %c20 = arith.constant 20 : index
    %93 = memref.load %arg1[%c20] : memref<33xf32, #tpu.memory_space<smem>>
    %94 = vector.broadcast %93 : f32 to vector<8x128xf32>
    %95 = arith.mulf %8, %94 : vector<8x128xf32>
    %c21 = arith.constant 21 : index
    %96 = memref.load %arg1[%c21] : memref<33xf32, #tpu.memory_space<smem>>
    %97 = vector.broadcast %96 : f32 to vector<8x128xf32>
    %98 = arith.mulf %16, %97 : vector<8x128xf32>
    %99 = arith.addf %95, %98 : vector<8x128xf32>
    %c22 = arith.constant 22 : index
    %100 = memref.load %arg1[%c22] : memref<33xf32, #tpu.memory_space<smem>>
    %101 = vector.broadcast %100 : f32 to vector<8x128xf32>
    %102 = arith.mulf %24, %101 : vector<8x128xf32>
    %103 = arith.addf %99, %102 : vector<8x128xf32>
    %c23 = arith.constant 23 : index
    %104 = memref.load %arg1[%c23] : memref<33xf32, #tpu.memory_space<smem>>
    %105 = vector.broadcast %104 : f32 to vector<8x128xf32>
    %106 = arith.mulf %32, %105 : vector<8x128xf32>
    %107 = arith.addf %103, %106 : vector<8x128xf32>
    %c27 = arith.constant 27 : index
    %108 = memref.load %arg1[%c27] : memref<33xf32, #tpu.memory_space<smem>>
    %109 = vector.broadcast %108 : f32 to vector<8x128xf32>
    %110 = arith.addf %107, %109 : vector<8x128xf32>
    %cst_8 = arith.constant 0.000000e+00 : f32
    %111 = vector.broadcast %cst_8 : f32 to vector<8x128xf32>
    %112 = arith.maximumf %110, %111 : vector<8x128xf32>
    %c28 = arith.constant 28 : index
    %113 = memref.load %arg1[%c28] : memref<33xf32, #tpu.memory_space<smem>>
    %114 = vector.broadcast %113 : f32 to vector<8x128xf32>
    %115 = arith.mulf %52, %114 : vector<8x128xf32>
    %c29 = arith.constant 29 : index
    %116 = memref.load %arg1[%c29] : memref<33xf32, #tpu.memory_space<smem>>
    %117 = vector.broadcast %116 : f32 to vector<8x128xf32>
    %118 = arith.mulf %72, %117 : vector<8x128xf32>
    %119 = arith.addf %115, %118 : vector<8x128xf32>
    %c30 = arith.constant 30 : index
    %120 = memref.load %arg1[%c30] : memref<33xf32, #tpu.memory_space<smem>>
    %121 = vector.broadcast %120 : f32 to vector<8x128xf32>
    %122 = arith.mulf %92, %121 : vector<8x128xf32>
    %123 = arith.addf %119, %122 : vector<8x128xf32>
    %c31 = arith.constant 31 : index
    %124 = memref.load %arg1[%c31] : memref<33xf32, #tpu.memory_space<smem>>
    %125 = vector.broadcast %124 : f32 to vector<8x128xf32>
    %126 = arith.mulf %112, %125 : vector<8x128xf32>
    %127 = arith.addf %123, %126 : vector<8x128xf32>
    %c32 = arith.constant 32 : index
    %128 = memref.load %arg1[%c32] : memref<33xf32, #tpu.memory_space<smem>>
    %129 = vector.broadcast %128 : f32 to vector<8x128xf32>
    %130 = arith.addf %127, %129 : vector<8x128xf32>
    %c0_9 = arith.constant 0 : index
    %c0_10 = arith.constant 0 : index
    %131 = vector.load %arg3[%c0_9, %c0_10] : memref<8x128xf32, #tpu.memory_space<vmem>>, vector<8x128xf32>
    tpu.vector_store %arg3[%c0_9, %c0_10], %130 {strides = array<i32>} : memref<8x128xf32, #tpu.memory_space<vmem>>, vector<8x128xf32>,
    return
  }
  func.func @transform_0(%arg0: i32) -> i32 {
    %c0_i32 = arith.constant 0 : i32
    %c0_i32_0 = arith.constant 0 : i32
    return %c0_i32 : i32
  }
  func.func @transform_1(%arg0: i32) -> (i32, i32) {
    %c0_i32 = arith.constant 0 : i32
    %c0_i32_0 = arith.constant 0 : i32
    return %arg0, %c0_i32 : i32, i32
  }
  func.func @transform_2(%arg0: i32) -> (i32, i32) {
    %c0_i32 = arith.constant 0 : i32
    %c0_i32_0 = arith.constant 0 : i32
    return %arg0, %c0_i32 : i32, i32
  }
}

</mosaic_0001>

<llo_original>
// kernel: tpu_custom_call.1
$region0: #{tpu_custom_call.1}
  #allocation0 [shape = 'u32[]', space=smem, size = 0x4, offset = 0x4, fixed_abs, tag = 'smem constant byte address 0x4 - core index']
  #allocation1 [shape = 'u32[144,128]{1,0:T(1,128)}', space=vmem, size = 0x12000, scoped, tag = 'internal scratch']
  %s0 = inlined_call_operand.hbm [shape: f32[33], index: 0, kind: input, shape index: {}]
  %s1 = inlined_call_operand.hbm [shape: f32[8,128], index: 1, kind: input, shape index: {}]
  %s2 = inlined_call_operand.hbm [shape: f32[8,128], index: 2, kind: output, shape index: {}]
  %s3 = sld [smem:[#allocation0]]
  $region26: #{tpu_custom_call.1} parent=0
    _
  %s5 = ssub.s32 1, %s3
  %s6 = scalar_select 0, %s5, %s3
  $region1: #{tpu_custom_call.1} parent=0
    #allocation2 [shape = 'u8[512]{0}', space=smem, size = 0x200, scoped, tag = 'input window, operand 0, single buffered']
    #allocation3 [shape = 's32[1]{0}', space=sflag, size = 0x4, scoped, tag = 'scoped memory for tpu_custom_call.1']
    #allocation4 [shape = 's32[1]{0}', space=sflag, size = 0x4, scoped, tag = 'scoped memory for tpu_custom_call.1']
    #allocation5 [shape = 's32[1]{0}', space=sflag, size = 0x4, scoped, tag = 'scoped memory for tpu_custom_call.1']
    #allocation6 [shape = 'u8[4096]{0}', space=vmem, size = 0x1000, scoped, tag = 'input window, operand 1, single buffered']
    #allocation7 [shape = 'u8[4096]{0}', space=vmem, size = 0x1000, scoped, tag = 'output window, operand 0, single buffered']
    %7 = vsyncpa [#allocation5], 0
    %8 = vsyncpa [#allocation3], 0
    %9 = vsyncpa [#allocation4], 0
    // Predicated region
    $region2: #{tpu_custom_call.1} parent=1 // pred_check
      _
    $region3: #{tpu_custom_call.1} parent=1 // pred_check_branch
      %11 = sbr.rel (0) target = $region5
    $region4: #{tpu_custom_call.1} parent=1 // pred_region
      %s13 = ssub.s32 16, 16
      %14 = vsyncadd [#allocation5], %s13
      %17 = dma.hbm_to_smem %s0, 16, [#allocation2], [#allocation5]
    $region5: #{tpu_custom_call.1} parent=1 // pred_fallthru
      _
    // Predicated region
    $region6: #{tpu_custom_call.1} parent=1 // pred_check
      _
    $region7: #{tpu_custom_call.1} parent=1 // pred_check_branch
      %19 = sbr.rel (0) target = $region9
    $region8: #{tpu_custom_call.1} parent=1 // pred_region
      %s21 = ssub.s32 128, 128
      %22 = vsyncadd [#allocation3], %s21
      %s24 = sshll.u32 [#allocation6], 4
      %s25 = int_to_ptr.vmem [resolvable:$true] %s24
      %27 = dma.hbm_to_vmem [thread:$0]  %s1, 128, %s25, [#allocation3]
    $region9: #{tpu_custom_call.1} parent=1 // pred_fallthru
      _
    // Predicated region
    $region10: #{tpu_custom_call.1} parent=1 // pred_check
      _
    $region11: #{tpu_custom_call.1} parent=1 // pred_check_branch
      %29 = sbr.rel (0) target = $region13
    $region12: #{tpu_custom_call.1} parent=1 // pred_region
      %30 = dma.done [#allocation5], 16
    $region13: #{tpu_custom_call.1} parent=1 // pred_fallthru
      _
    // Predicated region
    $region14: #{tpu_custom_call.1} parent=1 // pred_check
      _
    $region15: #{tpu_custom_call.1} parent=1 // pred_check_branch
      %32 = sbr.rel (0) target = $region17
    $region16: #{tpu_custom_call.1} parent=1 // pred_region
      %33 = dma.done [#allocation3], 128
    $region17: #{tpu_custom_call.1} parent=1 // pred_fallthru
      _
    %34 = sfence
    %v35 = vld [vmem:[#allocation6] sm:$0xff]
    %s36 = sld [smem:[#allocation2]]
    %v37 = vstv %s36
    %v38 = vmul.f32 %v35, %v37
    %s39 = sld [smem:[#allocation2 + $0x4]]
    %v40 = vstv %s39
    %v41 = vadd.f32 %v38, %v40
    %v42 = vmax.f32 %v41, 0.0
    %s43 = sld [smem:[#allocation2 + $0x1]]
    %v44 = vstv %s43
    %v45 = vmul.f32 %v35, %v44
    %s46 = sld [smem:[#allocation2 + $0x5]]
    %v47 = vstv %s46
    %v48 = vadd.f32 %v45, %v47
    %v49 = vmax.f32 %v48, 0.0
    %s50 = sld [smem:[#allocation2 + $0x2]]
    %v51 = vstv %s50
    %v52 = vmul.f32 %v35, %v51
    %s53 = sld [smem:[#allocation2 + $0x6]]
    %v54 = vstv %s53
    %v55 = vadd.f32 %v52, %v54
    %v56 = vmax.f32 %v55, 0.0
    %s57 = sld [smem:[#allocation2 + $0x3]]
    %v58 = vstv %s57
    %v59 = vmul.f32 %v35, %v58
    %s60 = sld [smem:[#allocation2 + $0x7]]
    %v61 = vstv %s60
    %v62 = vadd.f32 %v59, %v61
    %v63 = vmax.f32 %v62, 0.0
    %s64 = sld [smem:[#allocation2 + $0x8]]
    %v65 = vstv %s64
    %v66 = vmul.f32 %v42, %v65
    %s67 = sld [smem:[#allocation2 + $0x9]]
    %v68 = vstv %s67
    %v69 = vmul.f32 %v49, %v68
    %v70 = vadd.f32 %v66, %v69
    %s71 = sld [smem:[#allocation2 + $0xa]]
    %v72 = vstv %s71
    %v73 = vmul.f32 %v56, %v72
    %v74 = vadd.f32 %v70, %v73
    %s75 = sld [smem:[#allocation2 + $0xb]]
    %v76 = vstv %s75
    %v77 = vmul.f32 %v63, %v76
    %v78 = vadd.f32 %v74, %v77
    %s79 = sld [smem:[#allocation2 + $0x18]]
    %v80 = vstv %s79
    %v81 = vadd.f32 %v78, %v80
    %v82 = vmax.f32 %v81, 0.0
    %s83 = sld [smem:[#allocation2 + $0xc]]
    %v84 = vstv %s83
    %v85 = vmul.f32 %v42, %v84
    %s86 = sld [smem:[#allocation2 + $0xd]]
    %v87 = vstv %s86
    %v88 = vmul.f32 %v49, %v87
    %v89 = vadd.f32 %v85, %v88
    %s90 = sld [smem:[#allocation2 + $0xe]]
    %v91 = vstv %s90
    %v92 = vmul.f32 %v56, %v91
    %v93 = vadd.f32 %v89, %v92
    %s94 = sld [smem:[#allocation2 + $0xf]]
    %v95 = vstv %s94
    %v96 = vmul.f32 %v63, %v95
    %v97 = vadd.f32 %v93, %v96
    %s98 = sld [smem:[#allocation2 + $0x19]]
    %v99 = vstv %s98
    %v100 = vadd.f32 %v97, %v99
    %v101 = vmax.f32 %v100, 0.0
    %s102 = sld [smem:[#allocation2 + $0x10]]
    %v103 = vstv %s102
    %v104 = vmul.f32 %v42, %v103
    %s105 = sld [smem:[#allocation2 + $0x11]]
    %v106 = vstv %s105
    %v107 = vmul.f32 %v49, %v106
    %v108 = vadd.f32 %v104, %v107
    %s109 = sld [smem:[#allocation2 + $0x12]]
    %v110 = vstv %s109
    %v111 = vmul.f32 %v56, %v110
    %v112 = vadd.f32 %v108, %v111
    %s113 = sld [smem:[#allocation2 + $0x13]]
    %v114 = vstv %s113
    %v115 = vmul.f32 %v63, %v114
    %v116 = vadd.f32 %v112, %v115
    %s117 = sld [smem:[#allocation2 + $0x1a]]
    %v118 = vstv %s117
    %v119 = vadd.f32 %v116, %v118
    %v120 = vmax.f32 %v119, 0.0
    %s121 = sld [smem:[#allocation2 + $0x14]]
    %v122 = vstv %s121
    %v123 = vmul.f32 %v42, %v122
    %s124 = sld [smem:[#allocation2 + $0x15]]
    %v125 = vstv %s124
    %v126 = vmul.f32 %v49, %v125
    %v127 = vadd.f32 %v123, %v126
    %s128 = sld [smem:[#allocation2 + $0x16]]
    %v129 = vstv %s128
    %v130 = vmul.f32 %v56, %v129
    %v131 = vadd.f32 %v127, %v130
    %s132 = sld [smem:[#allocation2 + $0x17]]
    %v133 = vstv %s132
    %v134 = vmul.f32 %v63, %v133
    %v135 = vadd.f32 %v131, %v134
    %s136 = sld [smem:[#allocation2 + $0x1b]]
    %v137 = vstv %s136
    %v138 = vadd.f32 %v135, %v137
    %v139 = vmax.f32 %v138, 0.0
    %s140 = sld [smem:[#allocation2 + $0x1c]]
    %v141 = vstv %s140
    %v142 = vmul.f32 %v82, %v141
    %s143 = sld [smem:[#allocation2 + $0x1d]]
    %v144 = vstv %s143
    %v145 = vmul.f32 %v101, %v144
    %v146 = vadd.f32 %v142, %v145
    %s147 = sld [smem:[#allocation2 + $0x1e]]
    %v148 = vstv %s147
    %v149 = vmul.f32 %v120, %v148
    %v150 = vadd.f32 %v146, %v149
    %s151 = sld [smem:[#allocation2 + $0x1f]]
    %v152 = vstv %s151
    %v153 = vmul.f32 %v139, %v152
    %v154 = vadd.f32 %v150, %v153
    %s155 = sld [smem:[#allocation2 + $0x20]]
    %v156 = vstv %s155
    %v157 = vadd.f32 %v154, %v156
    %158 = vst [vmem:[#allocation7] sm:$0xff] %v157
    // Predicated region
    $region18: #{tpu_custom_call.1} parent=1 // pred_check
      _
    $region19: #{tpu_custom_call.1} parent=1 // pred_check_branch
      %160 = sbr.rel (0) target = $region21
    $region20: #{tpu_custom_call.1} parent=1 // pred_region
      %s162 = ssub.s32 128, 128
      %163 = vsyncadd [#allocation4], %s162
      %s165 = sshll.u32 [#allocation7], 4
      %s166 = int_to_ptr.vmem [resolvable:$true] %s165
      %168 = dma.vmem_to_hbm [thread:$0]  %s166, 128, %s2, [#allocation4]
    $region21: #{tpu_custom_call.1} parent=1 // pred_fallthru
      _
    // Predicated region
    $region22: #{tpu_custom_call.1} parent=1 // pred_check
      _
    $region23: #{tpu_custom_call.1} parent=1 // pred_check_branch
      %170 = sbr.rel (0) target = $region25
    $region24: #{tpu_custom_call.1} parent=1 // pred_region
      %171 = dma.done [#allocation4], 128
    $region25: #{tpu_custom_call.1} parent=1 // pred_fallthru
      _
    %172 = vsyncpa [#allocation3], 1
    %173 = vsyncpa [#allocation4], 1
    %174 = vsyncpa [#allocation5], 1

</llo_original>
